<compile_context>
chip_gen: v7x
topology: tpu7x:2x2x1
jax: 0.10.0
libtpu: 0.0.40
codegen_flags: <defaults>
</compile_context>

<pallas_src>
import functools

import jax
import jax.numpy as jnp
import numpy as np
from jax.experimental import pallas as pl
from jax.experimental.pallas import tpu as pltpu


def afm_kernel(xT_ref, tab_ref, attwT_ref, w2_ref, out_ref):
    """One batch tile, batch on the lane axis.

    xT_ref    : (F, TB)      int32    feature indices for this batch tile (field-major)
    tab_ref   : (F, D+1, V)  bfloat16 per-field [e2[i]^T ; w_first*e1[i] (+bias on field 0)]
    attwT_ref : (A=D, D)     float32  attention_W transposed
    w2_ref    : (D, 1)       float32  output-layer weights for the attended features
    out_ref   : (1, 1, TB)   float32  lane-dense output row for this tile
    """
    F, TB = xT_ref.shape
    Dp1, V = tab_ref.shape[1], tab_ref.shape[2]
    D = Dp1 - 1
    f32 = jnp.float32
    bf16 = jnp.bfloat16

    xT = xT_ref[...]                                               # (F, TB) int32
    iota_v = jax.lax.broadcasted_iota(jnp.int32, (V, TB), 0)       # vocab id on sublanes

    # S^T[v, b] = sum_j 1[x[b, j] == v]  -- built incrementally (bounded live set).
    sT = jnp.zeros((V, TB), f32)
    for j in range(F):
        sT = sT + (iota_v == xT[j:j + 1, :]).astype(f32)

    first_T = jnp.zeros((1, TB), f32)       # already scaled by w_first (+ bias, folded in wrapper)
    second_T = jnp.zeros((D, TB), f32)
    for i in range(F):
        ohT = (iota_v == xT[i:i + 1, :]).astype(f32)               # (V, TB) one-hot of field i
        # Fused e_i / g_i lookup: ONE bf16 MXU matmul per field (table pushed once).
        rhs = jnp.concatenate([ohT, sT], axis=1).astype(bf16)      # (V, 2*TB)
        m = jnp.dot(tab_ref[i], rhs, preferred_element_type=f32)   # (D+1, 2*TB), f32 accumulate
        e_iT = m[:D, :TB]                                          # e2[i, x[:, i], :]^T
        g_iT = m[:D, TB:]                                          # sum_j e2[i, x[:, j], :]^T
        second_T = second_T + e_iT * g_iT                          # table i both times, as in ref
        first_T = first_T + m[D:, :TB]                             # pre-scaled first-order row

    # Attention softmax over the factor axis (A == D); batch stays on lanes -> sublane reductions.
    logits_T = jnp.dot(attwT_ref[...], second_T, preferred_element_type=f32)   # (A, TB)
    mx = jnp.max(logits_T, axis=0, keepdims=True)
    p = jnp.exp(logits_T - mx)
    denom = jnp.sum(p, axis=0, keepdims=True)
    scores_T = p * pl.reciprocal(denom, approx=True)               # EUP reciprocal (free slot)
    attended_T = scores_T * second_T                               # (D, TB)
    # TODO(synk): dropout treated as identity (eval mode).
    # TODO(synk): reference's torch.sum(dim=1)+cat is shape-inconsistent; we keep the per-dimension
    # attended vector so the declared Linear(embedding_dim+1, 1) applies (same as previous version).

    # Output layer: VPU multiply + sublane reduce (no N=1 MXU matmul); w_first/bias already folded.
    out_row = first_T + jnp.sum(attended_T * w2_ref[...], axis=0, keepdims=True)   # (1, TB)
    out_ref[...] = out_row[None]


@functools.partial(jax.jit, static_argnames=("block_b",))
def afm_forward(x, e1, e2, att_w, out_w, out_b, *, block_b=128):
    B, F = x.shape
    V = e1.shape[1]
    D = e2.shape[2]
    A = att_w.shape[1]
    assert A == D, "reference forward requires attention_factor == embedding_dim"
    assert V <= 256, "one-hot-as-matmul lookup only pays off for tiny vocab"
    # TODO(synk): for production vocab sizes keep e2 in HBM (memory_space=pl.ANY) and DMA-gather the
    # rows addressed by scalar-prefetched indices instead of the one-hot matmul lookup.

    # Fold the output layer's first-order weight and the bias into the tiny first-order table so the
    # kernel needs no scalar operands (exactly one one-hot hit per field -> bias added once via field 0).
    w_first = out_w[0, 0]
    bias = out_b[0]
    e1_row = w_first * e1
    e1_row = e1_row.at[0].add(bias)

    # Combined per-field table, transposed for the batch-on-lanes layout, stored bf16:
    #   tab[i] = [ e2[i]^T (D, V) ; w_first*e1[i] (+bias) (1, V) ]  -> (D+1, V)
    tab = jnp.concatenate(
        [jnp.transpose(e2, (0, 2, 1)), e1_row[:, None, :]], axis=1
    ).astype(jnp.bfloat16)                                          # (F, D+1, V)

    attwT = att_w.T.astype(jnp.float32)                             # (A, D)
    w2 = out_w[0, 1:].reshape(D, 1).astype(jnp.float32)             # (D, 1)

    # Batch tiling: pad B to a multiple of block_b; batch rides the lane axis.
    nt = pl.cdiv(B, block_b)
    b_pad = nt * block_b
    xT = jnp.pad(x, ((0, b_pad - B), (0, 0))).T.astype(jnp.int32)   # (F, b_pad)

    out = pl.pallas_call(
        afm_kernel,
        out_shape=jax.ShapeDtypeStruct((nt, 1, block_b), jnp.float32),
        grid=(nt,),
        in_specs=[
            pl.BlockSpec((F, block_b), lambda b: (0, b)),           # x tile (batch on lanes)
            pl.BlockSpec((F, D + 1, V), lambda b: (0, 0, 0)),       # combined bf16 table, replicated
            pl.BlockSpec((A, D), lambda b: (0, 0)),                 # attention_W^T, replicated
            pl.BlockSpec((D, 1), lambda b: (0, 0)),                 # output weights, replicated
        ],
        out_specs=pl.BlockSpec((1, 1, block_b), lambda b: (b, 0, 0)),
        compiler_params=pltpu.CompilerParams(
            dimension_semantics=("parallel",),       # batch tiles split across TCs (v7x megacore)
            vmem_limit_bytes=32 * 1024 * 1024,       # raise for larger tables/tiles on 128-MiB parts
        ),
    )(xT, tab, attwT, w2)

    return out.reshape(b_pad, 1)[:B]


def afm_reference(x, e1, e2, att_w, out_w, out_b):
    """Pure-JAX reference with the same repaired semantics and the same bf16 table quantization
    (so the comparison isolates kernel numerics: accumulation order + approx reciprocal)."""
    B, F = x.shape
    D = e2.shape[2]
    w_first = out_w[0, 0]
    bias = out_b[0]

    e2q = e2.astype(jnp.bfloat16).astype(jnp.float32)
    e1_row = w_first * e1
    e1_row = e1_row.at[0].add(bias)
    e1q = e1_row.astype(jnp.bfloat16).astype(jnp.float32)

    first = jnp.zeros((B, 1), jnp.float32)
    for i in range(F):
        first = first + e1q[i][x[:, i]][:, None]        # already w_first-scaled (+ bias via field 0)

    second = jnp.zeros((B, D), jnp.float32)
    for i in range(F):
        for j in range(F):
            second = second + e2q[i][x[:, i]] * e2q[i][x[:, j]]   # table i both times (as in ref)

    scores = jax.nn.softmax(second @ att_w, axis=1)
    attended = scores * second
    w2 = out_w[0, 1:]
    return first + attended @ w2[:, None]


if __name__ == "__main__":
    # Small, module-consistent shapes.
    B, F, V, D = 8, 4, 16, 8          # batch, num_fields, vocab per field, embedding_dim
    A = D                             # attention_factor == embedding_dim (required by the
                                      # elementwise multiply in the reference forward)

    key = jax.random.PRNGKey(0)
    k_x, k_e1, k_e2, k_w, k_o, k_b = jax.random.split(key, 6)

    x = jax.random.randint(k_x, (B, F), 0, V, dtype=jnp.int32)
    e1 = jax.random.normal(k_e1, (F, V), dtype=jnp.float32)        # first-order tables
    e2 = jax.random.normal(k_e2, (F, V, D), dtype=jnp.float32)     # second-order tables
    att_w = jax.random.normal(k_w, (D, A), dtype=jnp.float32)      # attention_W
    out_w = jax.random.normal(k_o, (1, D + 1), dtype=jnp.float32) * 0.1   # Linear weight
    out_b = jax.random.normal(k_b, (1,), dtype=jnp.float32) * 0.1         # Linear bias

    out = afm_forward(x, e1, e2, att_w, out_w, out_b)
    jax.block_until_ready(out)

    ref = afm_reference(x, e1, e2, att_w, out_w, out_b)
    np.testing.assert_allclose(np.asarray(out), np.asarray(ref), rtol=1e-2, atol=1e-2)

    print("KERNEL_OK")
</pallas_src>

<mosaic_0001>
module attributes {stable_mosaic.version = 11 : i64} {
  func.func @afm_kernel(%arg0: i32, %arg1: memref<4x128xi32, #tpu.memory_space<vmem>>, %arg2: memref<4x9x16xbf16, #tpu.memory_space<vmem>>, %arg3: memref<8x8xf32, #tpu.memory_space<vmem>>, %arg4: memref<8x1xf32, #tpu.memory_space<vmem>>, %arg5: memref<1x1x128xf32, #tpu.memory_space<vmem>>) attributes {dimension_semantics = [#tpu.dimension_semantics<parallel>], iteration_bounds = array<i64: 1>, scalar_prefetch = 0 : i64, scratch_operands = 0 : i64, tpu.core_type = #tpu.core_type<tc>, window_params = [{transform_indices = @transform_0, window_bounds = array<i64: 4, 128>}, {pipeline_mode = #tpu.pipeline_mode<synchronous>, transform_indices = @transform_1, window_bounds = array<i64: 4, 9, 16>}, {pipeline_mode = #tpu.pipeline_mode<synchronous>, transform_indices = @transform_2, window_bounds = array<i64: 8, 8>}, {pipeline_mode = #tpu.pipeline_mode<synchronous>, transform_indices = @transform_3, window_bounds = array<i64: 8, 1>}, {transform_indices = @transform_4, window_bounds = array<i64: 1, 1, 128>}]} {
    %c0 = arith.constant 0 : index
    %c0_0 = arith.constant 0 : index
    %0 = vector.load %arg1[%c0, %c0_0] : memref<4x128xi32, #tpu.memory_space<vmem>>, vector<4x128xi32>
    %1 = tpu.iota {dimensions = array<i32: 0>} : vector<16x128xi32>
    %cst = arith.constant 0.000000e+00 : f32
    %2 = vector.broadcast %cst : f32 to vector<16x128xf32>
    %3 = vector.extract_strided_slice %0 {offsets = [0, 0], sizes = [1, 128], strides = [1, 1]} : vector<4x128xi32> to vector<1x128xi32>
    %4 = vector.broadcast %3 : vector<1x128xi32> to vector<16x128xi32>
    %5 = arith.cmpi eq, %1, %4 : vector<16x128xi32>
    %6 = arith.extui %5 : vector<16x128xi1> to vector<16x128xi32>
    %7 = arith.sitofp %6 : vector<16x128xi32> to vector<16x128xf32>
    %8 = arith.addf %2, %7 : vector<16x128xf32>
    %9 = vector.extract_strided_slice %0 {offsets = [1, 0], sizes = [1, 128], strides = [1, 1]} : vector<4x128xi32> to vector<1x128xi32>
    %10 = vector.broadcast %9 : vector<1x128xi32> to vector<16x128xi32>
    %11 = arith.cmpi eq, %1, %10 : vector<16x128xi32>
    %12 = arith.extui %11 : vector<16x128xi1> to vector<16x128xi32>
    %13 = arith.sitofp %12 : vector<16x128xi32> to vector<16x128xf32>
    %14 = arith.addf %8, %13 : vector<16x128xf32>
    %15 = vector.extract_strided_slice %0 {offsets = [2, 0], sizes = [1, 128], strides = [1, 1]} : vector<4x128xi32> to vector<1x128xi32>
    %16 = vector.broadcast %15 : vector<1x128xi32> to vector<16x128xi32>
    %17 = arith.cmpi eq, %1, %16 : vector<16x128xi32>
    %18 = arith.extui %17 : vector<16x128xi1> to vector<16x128xi32>
    %19 = arith.sitofp %18 : vector<16x128xi32> to vector<16x128xf32>
    %20 = arith.addf %14, %19 : vector<16x128xf32>
    %21 = vector.extract_strided_slice %0 {offsets = [3, 0], sizes = [1, 128], strides = [1, 1]} : vector<4x128xi32> to vector<1x128xi32>
    %22 = vector.broadcast %21 : vector<1x128xi32> to vector<16x128xi32>
    %23 = arith.cmpi eq, %1, %22 : vector<16x128xi32>
    %24 = arith.extui %23 : vector<16x128xi1> to vector<16x128xi32>
    %25 = arith.sitofp %24 : vector<16x128xi32> to vector<16x128xf32>
    %26 = arith.addf %20, %25 : vector<16x128xf32>
    %cst_1 = arith.constant 0.000000e+00 : f32
    %27 = vector.broadcast %cst_1 : f32 to vector<1x128xf32>
    %cst_2 = arith.constant 0.000000e+00 : f32
    %28 = vector.broadcast %cst_2 : f32 to vector<8x128xf32>
    %29 = vector.extract_strided_slice %0 {offsets = [0, 0], sizes = [1, 128], strides = [1, 1]} : vector<4x128xi32> to vector<1x128xi32>
    %30 = vector.broadcast %29 : vector<1x128xi32> to vector<16x128xi32>
    %31 = arith.cmpi eq, %1, %30 : vector<16x128xi32>
    %32 = arith.extui %31 : vector<16x128xi1> to vector<16x128xi32>
    %33 = arith.sitofp %32 : vector<16x128xi32> to vector<16x128xf32>
    %34 = tpu.concatenate %33, %26 in 1 : vector<16x128xf32>, vector<16x128xf32> -> vector<16x256xf32>
    %35 = arith.truncf %34 : vector<16x256xf32> to vector<16x256xbf16>
    %c0_3 = arith.constant 0 : index
    %c0_4 = arith.constant 0 : index
    %c0_5 = arith.constant 0 : index
    %36 = vector.load %arg2[%c0_3, %c0_4, %c0_5] : memref<4x9x16xbf16, #tpu.memory_space<vmem>>, vector<1x9x16xbf16>
    %37 = vector.shape_cast %36 : vector<1x9x16xbf16> to vector<9x16xbf16>
    %cst_6 = arith.constant dense<0.000000e+00> : vector<9x256xf32>
    %38 = tpu.matmul %37, %35, %cst_6 {dimension_numbers = #tpu.dot_dimension_numbers<[1], [0], [0], [1], [0, 0, 1, 1], [], []>} : vector<9x16xbf16>, vector<16x256xbf16>, vector<9x256xf32> -> vector<9x256xf32>
    %39 = vector.extract_strided_slice %38 {offsets = [0, 0], sizes = [8, 128], strides = [1, 1]} : vector<9x256xf32> to vector<8x128xf32>
    %40 = vector.extract_strided_slice %38 {offsets = [0, 128], sizes = [8, 128], strides = [1, 1]} : vector<9x256xf32> to vector<8x128xf32>
    %41 = arith.mulf %39, %40 : vector<8x128xf32>
    %42 = arith.addf %28, %41 : vector<8x128xf32>
    %43 = vector.extract_strided_slice %38 {offsets = [8, 0], sizes = [1, 128], strides = [1, 1]} : vector<9x256xf32> to vector<1x128xf32>
    %44 = arith.addf %27, %43 : vector<1x128xf32>
    %45 = vector.extract_strided_slice %0 {offsets = [1, 0], sizes = [1, 128], strides = [1, 1]} : vector<4x128xi32> to vector<1x128xi32>
    %46 = vector.broadcast %45 : vector<1x128xi32> to vector<16x128xi32>
    %47 = arith.cmpi eq, %1, %46 : vector<16x128xi32>
    %48 = arith.extui %47 : vector<16x128xi1> to vector<16x128xi32>
    %49 = arith.sitofp %48 : vector<16x128xi32> to vector<16x128xf32>
    %50 = tpu.concatenate %49, %26 in 1 : vector<16x128xf32>, vector<16x128xf32> -> vector<16x256xf32>
    %51 = arith.truncf %50 : vector<16x256xf32> to vector<16x256xbf16>
    %c1 = arith.constant 1 : index
    %c0_7 = arith.constant 0 : index
    %c0_8 = arith.constant 0 : index
    %52 = vector.load %arg2[%c1, %c0_7, %c0_8] : memref<4x9x16xbf16, #tpu.memory_space<vmem>>, vector<1x9x16xbf16>
    %53 = vector.shape_cast %52 : vector<1x9x16xbf16> to vector<9x16xbf16>
    %cst_9 = arith.constant dense<0.000000e+00> : vector<9x256xf32>
    %54 = tpu.matmul %53, %51, %cst_9 {dimension_numbers = #tpu.dot_dimension_numbers<[1], [0], [0], [1], [0, 0, 1, 1], [], []>} : vector<9x16xbf16>, vector<16x256xbf16>, vector<9x256xf32> -> vector<9x256xf32>
    %55 = vector.extract_strided_slice %54 {offsets = [0, 0], sizes = [8, 128], strides = [1, 1]} : vector<9x256xf32> to vector<8x128xf32>
    %56 = vector.extract_strided_slice %54 {offsets = [0, 128], sizes = [8, 128], strides = [1, 1]} : vector<9x256xf32> to vector<8x128xf32>
    %57 = arith.mulf %55, %56 : vector<8x128xf32>
    %58 = arith.addf %42, %57 : vector<8x128xf32>
    %59 = vector.extract_strided_slice %54 {offsets = [8, 0], sizes = [1, 128], strides = [1, 1]} : vector<9x256xf32> to vector<1x128xf32>
    %60 = arith.addf %44, %59 : vector<1x128xf32>
    %61 = vector.extract_strided_slice %0 {offsets = [2, 0], sizes = [1, 128], strides = [1, 1]} : vector<4x128xi32> to vector<1x128xi32>
    %62 = vector.broadcast %61 : vector<1x128xi32> to vector<16x128xi32>
    %63 = arith.cmpi eq, %1, %62 : vector<16x128xi32>
    %64 = arith.extui %63 : vector<16x128xi1> to vector<16x128xi32>
    %65 = arith.sitofp %64 : vector<16x128xi32> to vector<16x128xf32>
    %66 = tpu.concatenate %65, %26 in 1 : vector<16x128xf32>, vector<16x128xf32> -> vector<16x256xf32>
    %67 = arith.truncf %66 : vector<16x256xf32> to vector<16x256xbf16>
    %c2 = arith.constant 2 : index
    %c0_10 = arith.constant 0 : index
    %c0_11 = arith.constant 0 : index
    %68 = vector.load %arg2[%c2, %c0_10, %c0_11] : memref<4x9x16xbf16, #tpu.memory_space<vmem>>, vector<1x9x16xbf16>
    %69 = vector.shape_cast %68 : vector<1x9x16xbf16> to vector<9x16xbf16>
    %cst_12 = arith.constant dense<0.000000e+00> : vector<9x256xf32>
    %70 = tpu.matmul %69, %67, %cst_12 {dimension_numbers = #tpu.dot_dimension_numbers<[1], [0], [0], [1], [0, 0, 1, 1], [], []>} : vector<9x16xbf16>, vector<16x256xbf16>, vector<9x256xf32> -> vector<9x256xf32>
    %71 = vector.extract_strided_slice %70 {offsets = [0, 0], sizes = [8, 128], strides = [1, 1]} : vector<9x256xf32> to vector<8x128xf32>
    %72 = vector.extract_strided_slice %70 {offsets = [0, 128], sizes = [8, 128], strides = [1, 1]} : vector<9x256xf32> to vector<8x128xf32>
    %73 = arith.mulf %71, %72 : vector<8x128xf32>
    %74 = arith.addf %58, %73 : vector<8x128xf32>
    %75 = vector.extract_strided_slice %70 {offsets = [8, 0], sizes = [1, 128], strides = [1, 1]} : vector<9x256xf32> to vector<1x128xf32>
    %76 = arith.addf %60, %75 : vector<1x128xf32>
    %77 = vector.extract_strided_slice %0 {offsets = [3, 0], sizes = [1, 128], strides = [1, 1]} : vector<4x128xi32> to vector<1x128xi32>
    %78 = vector.broadcast %77 : vector<1x128xi32> to vector<16x128xi32>
    %79 = arith.cmpi eq, %1, %78 : vector<16x128xi32>
    %80 = arith.extui %79 : vector<16x128xi1> to vector<16x128xi32>
    %81 = arith.sitofp %80 : vector<16x128xi32> to vector<16x128xf32>
    %82 = tpu.concatenate %81, %26 in 1 : vector<16x128xf32>, vector<16x128xf32> -> vector<16x256xf32>
    %83 = arith.truncf %82 : vector<16x256xf32> to vector<16x256xbf16>
    %c3 = arith.constant 3 : index
    %c0_13 = arith.constant 0 : index
    %c0_14 = arith.constant 0 : index
    %84 = vector.load %arg2[%c3, %c0_13, %c0_14] : memref<4x9x16xbf16, #tpu.memory_space<vmem>>, vector<1x9x16xbf16>
    %85 = vector.shape_cast %84 : vector<1x9x16xbf16> to vector<9x16xbf16>
    %cst_15 = arith.constant dense<0.000000e+00> : vector<9x256xf32>
    %86 = tpu.matmul %85, %83, %cst_15 {dimension_numbers = #tpu.dot_dimension_numbers<[1], [0], [0], [1], [0, 0, 1, 1], [], []>} : vector<9x16xbf16>, vector<16x256xbf16>, vector<9x256xf32> -> vector<9x256xf32>
    %87 = vector.extract_strided_slice %86 {offsets = [0, 0], sizes = [8, 128], strides = [1, 1]} : vector<9x256xf32> to vector<8x128xf32>
    %88 = vector.extract_strided_slice %86 {offsets = [0, 128], sizes = [8, 128], strides = [1, 1]} : vector<9x256xf32> to vector<8x128xf32>
    %89 = arith.mulf %87, %88 : vector<8x128xf32>
    %90 = arith.addf %74, %89 : vector<8x128xf32>
    %91 = vector.extract_strided_slice %86 {offsets = [8, 0], sizes = [1, 128], strides = [1, 1]} : vector<9x256xf32> to vector<1x128xf32>
    %92 = arith.addf %76, %91 : vector<1x128xf32>
    %c0_16 = arith.constant 0 : index
    %c0_17 = arith.constant 0 : index
    %93 = vector.load %arg3[%c0_16, %c0_17] : memref<8x8xf32, #tpu.memory_space<vmem>>, vector<8x8xf32>
    %cst_18 = arith.constant dense<0.000000e+00> : vector<8x128xf32>
    %94 = tpu.matmul %93, %90, %cst_18 {dimension_numbers = #tpu.dot_dimension_numbers<[1], [0], [0], [1], [0, 0, 1, 1], [], []>} : vector<8x8xf32>, vector<8x128xf32>, vector<8x128xf32> -> vector<8x128xf32>
    %cst_19 = arith.constant dense<0xFF800000> : vector<128xf32>
    %95 = vector.multi_reduction <maximumf>, %94, %cst_19 [0] : vector<8x128xf32> to vector<128xf32>
    %96 = vector.shape_cast %95 : vector<128xf32> to vector<1x128xf32>
    %97 = vector.broadcast %96 : vector<1x128xf32> to vector<8x128xf32>
    %98 = arith.subf %94, %97 : vector<8x128xf32>
    %99 = math.exp %98 : vector<8x128xf32>
    %cst_20 = arith.constant dense<0.000000e+00> : vector<128xf32>
    %100 = vector.multi_reduction <add>, %99, %cst_20 [0] : vector<8x128xf32> to vector<128xf32>
    %101 = vector.shape_cast %100 : vector<128xf32> to vector<1x128xf32>
    %102 = tpu.reciprocal %101 {approx = true} : vector<1x128xf32> -> vector<1x128xf32>
    %103 = vector.broadcast %102 : vector<1x128xf32> to vector<8x128xf32>
    %104 = arith.mulf %99, %103 : vector<8x128xf32>
    %105 = arith.mulf %104, %90 : vector<8x128xf32>
    %c0_21 = arith.constant 0 : index
    %c0_22 = arith.constant 0 : index
    %106 = vector.load %arg4[%c0_21, %c0_22] : memref<8x1xf32, #tpu.memory_space<vmem>>, vector<8x1xf32>
    %107 = vector.broadcast %106 : vector<8x1xf32> to vector<8x128xf32>
    %108 = arith.mulf %105, %107 : vector<8x128xf32>
    %cst_23 = arith.constant dense<0.000000e+00> : vector<128xf32>
    %109 = vector.multi_reduction <add>, %108, %cst_23 [0] : vector<8x128xf32> to vector<128xf32>
    %110 = vector.shape_cast %109 : vector<128xf32> to vector<1x128xf32>
    %111 = arith.addf %92, %110 : vector<1x128xf32>
    %112 = vector.shape_cast %111 : vector<1x128xf32> to vector<1x1x128xf32>
    %c0_24 = arith.constant 0 : index
    %c0_25 = arith.constant 0 : index
    %c0_26 = arith.constant 0 : index
    %113 = vector.load %arg5[%c0_24, %c0_25, %c0_26] : memref<1x1x128xf32, #tpu.memory_space<vmem>>, vector<1x1x128xf32>
    tpu.vector_store %arg5[%c0_24, %c0_25, %c0_26], %112 {strides = array<i32>} : memref<1x1x128xf32, #tpu.memory_space<vmem>>, vector<1x1x128xf32>,
    return
  }
  func.func @transform_0(%arg0: i32) -> (i32, i32) {
    %c0_i32 = arith.constant 0 : i32
    %c0_i32_0 = arith.constant 0 : i32
    return %c0_i32, %arg0 : i32, i32
  }
  func.func @transform_1(%arg0: i32) -> (i32, i32, i32) {
    %c0_i32 = arith.constant 0 : i32
    %c0_i32_0 = arith.constant 0 : i32
    %c0_i32_1 = arith.constant 0 : i32
    %c0_i32_2 = arith.constant 0 : i32
    return %c0_i32, %c0_i32_0, %c0_i32_1 : i32, i32, i32
  }
  func.func @transform_2(%arg0: i32) -> (i32, i32) {
    %c0_i32 = arith.constant 0 : i32
    %c0_i32_0 = arith.constant 0 : i32
    %c0_i32_1 = arith.constant 0 : i32
    return %c0_i32, %c0_i32_0 : i32, i32
  }
  func.func @transform_3(%arg0: i32) -> (i32, i32) {
    %c0_i32 = arith.constant 0 : i32
    %c0_i32_0 = arith.constant 0 : i32
    %c0_i32_1 = arith.constant 0 : i32
    return %c0_i32, %c0_i32_0 : i32, i32
  }
  func.func @transform_4(%arg0: i32) -> (i32, i32, i32) {
    %c0_i32 = arith.constant 0 : i32
    %c0_i32_0 = arith.constant 0 : i32
    %c0_i32_1 = arith.constant 0 : i32
    return %arg0, %c0_i32, %c0_i32_0 : i32, i32, i32
  }
}

</mosaic_0001>

<llo_original>
// kernel: afm_forward.1
$region0: #{afm_forward.1}
  #allocation0 [shape = 'u32[]', space=smem, size = 0x4, offset = 0x4, fixed_abs, tag = 'smem constant byte address 0x4 - core index']
  #allocation1 [shape = 'u32[144,128]{1,0:T(1,128)}', space=vmem, size = 0x12000, scoped, tag = 'internal scratch']
  %s0 = inlined_call_operand.vmem [shape: s32[4,128], index: 0, kind: input, shape index: {}]
  %s1 = inlined_call_operand.vmem [shape: bf16[4,9,16], index: 1, kind: input, shape index: {}]
  %s2 = inlined_call_operand.vmem [shape: f32[8,8], index: 2, kind: input, shape index: {}]
  %s3 = inlined_call_operand.vmem [shape: f32[8,1], index: 3, kind: input, shape index: {}]
  %s4 = inlined_call_operand.vmem [shape: f32[1,1,128], index: 4, kind: output, shape index: {}]
  %s5 = sld [smem:[#allocation0]]
  $region26: #{afm_forward.1} parent=0
    _
  %s7 = ssub.s32 1, %s5
  %s8 = scalar_select 0, %s7, %s5
  // Predicated region
  $region2: #{afm_forward.1} parent=0 // pred_check
    _
  $region3: #{afm_forward.1} parent=0 // pred_check_branch
    %10 = sbr.rel (0) target = $region5
  $region4: #{afm_forward.1} parent=0 // pred_region
    _
  $region5: #{afm_forward.1} parent=0 // pred_fallthru
    _
  // Predicated region
  $region6: #{afm_forward.1} parent=0 // pred_check
    _
  $region7: #{afm_forward.1} parent=0 // pred_check_branch
    %12 = sbr.rel (0) target = $region9
  $region8: #{afm_forward.1} parent=0 // pred_region
    _
  $region9: #{afm_forward.1} parent=0 // pred_fallthru
    _
  // Predicated region
  $region10: #{afm_forward.1} parent=0 // pred_check
    _
  $region11: #{afm_forward.1} parent=0 // pred_check_branch
    %14 = sbr.rel (0) target = $region13
  $region12: #{afm_forward.1} parent=0 // pred_region
    _
  $region13: #{afm_forward.1} parent=0 // pred_fallthru
    _
  // Predicated region
  $region14: #{afm_forward.1} parent=0 // pred_check
    _
  $region15: #{afm_forward.1} parent=0 // pred_check_branch
    %16 = sbr.rel (0) target = $region17
  $region16: #{afm_forward.1} parent=0 // pred_region
    _
  $region17: #{afm_forward.1} parent=0 // pred_fallthru
    _
  %v18 = vld [vmem:[%s0] sm:$0xf]
  %v19 = vlaneseq
  %v20 = vshrl.u32 %v19, 7
  %v21 = vadd.s32 %v20, 8
  %v22 = vlaneseq
  %v23 = vshrl.u32 %v22, 7
  %v24 = vsub.s32 0, %v23
  %v25 = vrot.slane %v18, %v24
  %vm26 = vcmp.eq.s32.totalorder %v20, %v25
  %vm27 = vcmp.eq.s32.totalorder %v21, %v25
  %v28 = vsel %vm26, 1, 0
  %v29 = vsel %vm27, 1, 0
  %v30 = vcvt.s32.f32 %v28
  %v31 = vcvt.s32.f32 %v29
  %v32 = vadd.f32 %v30, 0.0
  %v33 = vadd.f32 %v31, 0.0
  %v34 = vlaneseq
  %v35 = vshrl.u32 %v34, 7
  %v36 = vsub.s32 1, %v35
  %v37 = vrot.slane %v18, %v36
  %vm38 = vcmp.eq.s32.totalorder %v20, %v37
  %vm39 = vcmp.eq.s32.totalorder %v21, %v37
  %v40 = vsel %vm38, 1, 0
  %v41 = vsel %vm39, 1, 0
  %v42 = vcvt.s32.f32 %v40
  %v43 = vcvt.s32.f32 %v41
  %v44 = vadd.f32 %v32, %v42
  %v45 = vadd.f32 %v33, %v43
  %v46 = vlaneseq
  %v47 = vshrl.u32 %v46, 7
  %v48 = vsub.s32 2, %v47
  %v49 = vrot.slane %v18, %v48
  %vm50 = vcmp.eq.s32.totalorder %v20, %v49
  %vm51 = vcmp.eq.s32.totalorder %v21, %v49
  %v52 = vsel %vm50, 1, 0
  %v53 = vsel %vm51, 1, 0
  %v54 = vcvt.s32.f32 %v52
  %v55 = vcvt.s32.f32 %v53
  %v56 = vadd.f32 %v44, %v54
  %v57 = vadd.f32 %v45, %v55
  %v58 = vlaneseq
  %v59 = vshrl.u32 %v58, 7
  %v60 = vsub.s32 3, %v59
  %v61 = vrot.slane %v18, %v60
  %vm62 = vcmp.eq.s32.totalorder %v20, %v61
  %vm63 = vcmp.eq.s32.totalorder %v21, %v61
  %v64 = vsel %vm62, 1, 0
  %v65 = vsel %vm63, 1, 0
  %v66 = vcvt.s32.f32 %v64
  %v67 = vcvt.s32.f32 %v65
  %v68 = vadd.f32 %v56, %v66
  %v69 = vadd.f32 %v57, %v67
  %v70 = vpack.c.bf16 %v31, %v30
  %v71 = vpack.c.bf16 %v69, %v68
  %v72 = vld [vmem:[%s1] sm:$0xf]
  %v73 = vld [vmem:[%s1 + $0x4] sm:$0x1]
  %v76 = vunpack.c.l.b16 %v72
  %v77 = vunpack.c.l.b16 %v73
  %v78 = vpack.c.b16 %v77, %v76
  %vm79 = vcmask 130048
  %v81 = vsel %vm79, %v78, 0
  %83 = vmatprep.subr.bf16.mxu0 %v71
  %84 = vmatpush1.bf16.msra.mxu0 %v70
  %85 = vmatprep.subr.bf16.mxu0 0
  %86 = vmatpush1.bf16.msra.mxu0 0
  %87 = vmatprep.subr.bf16.mxu0 0
  %88 = vmatpush1.bf16.msra.mxu0 0
  %89 = vmatprep.subr.bf16.mxu0 0
  %90 = vmatpush1.bf16.msra.mxu0 0
  %91 = vmatprep.subr.bf16.mxu0 0
  %92 = vmatpush1.bf16.msra.mxu0 0
  %93 = vmatprep.subr.bf16.mxu0 0
  %94 = vmatpush1.bf16.msra.mxu0 0
  %95 = vmatprep.subr.bf16.mxu0 0
  %96 = vmatpush1.bf16.msra.mxu0 0
  %97 = vmatprep.subr.bf16.mxu0 0
  %98 = vmatpush1.bf16.msra.mxu0 0
  %99 = vmatprep.subr.bf16.mxu0 0
  %100 = vmatpush1.bf16.msra.mxu0 0
  %101 = vmatprep.subr.bf16.mxu0 0
  %102 = vmatpush1.bf16.msra.mxu0 0
  %103 = vmatprep.subr.bf16.mxu0 0
  %104 = vmatpush1.bf16.msra.mxu0 0
  %105 = vmatprep.subr.bf16.mxu0 0
  %106 = vmatpush1.bf16.msra.mxu0 0
  %107 = vmatprep.subr.bf16.mxu0 0
  %108 = vmatpush1.bf16.msra.mxu0 0
  %109 = vmatprep.subr.bf16.mxu0 0
  %110 = vmatpush1.bf16.msra.mxu0 0
  %111 = vmatprep.subr.bf16.mxu0 0
  %112 = vmatpush1.bf16.msra.mxu0 0
  %113 = vmatprep.subr.bf16.mxu0 0
  %114 = vmatpush1.bf16.msra.mxu0 0
  %115 = vmatprep.mubr.bf16.mxu0 0
  %116 = vmatmul.mubr.bf16.gmra.mrb[0].mxu0 %v81
  %v117 = vpop.f32.mrb[0].mxu0
  %v118 = vadd.f32 0.0, %v117
  %v119 = vpop.f32.mrb[0].mxu0
  %v120 = vadd.f32 0.0, %v119
  %v121 = vpop.f32.mrb[0].mxu0
  %v122 = vadd.f32 0.0, %v121
  %v123 = vpop.f32.mrb[0].mxu0
  %124 = vdwg.mxu0
  %v125 = vmul.f32 %v118, %v120
  %v126 = vadd.f32 %v125, 0.0
  %v127 = vadd.f32 %v122, 0.0
  %v128 = vpack.c.bf16 %v43, %v42
  %s129 = scalar_lea.vmem %s1, 8
  %v130 = vld [vmem:[%s129] sm:$0xf]
  %v131 = vld [vmem:[%s129 + $0x4] sm:$0x1]
  %v134 = vunpack.c.l.b16 %v130
  %v135 = vunpack.c.l.b16 %v131
  %v136 = vpack.c.b16 %v135, %v134
  %v138 = vsel %vm79, %v136, 0
  %140 = vmatprep.subr.bf16.mxu0 %v71
  %141 = vmatpush1.bf16.msra.mxu0 %v128
  %142 = vmatprep.subr.bf16.mxu0 0
  %143 = vmatpush1.bf16.msra.mxu0 0
  %144 = vmatprep.subr.bf16.mxu0 0
  %145 = vmatpush1.bf16.msra.mxu0 0
  %146 = vmatprep.subr.bf16.mxu0 0
  %147 = vmatpush1.bf16.msra.mxu0 0
  %148 = vmatprep.subr.bf16.mxu0 0
  %149 = vmatpush1.bf16.msra.mxu0 0
  %150 = vmatprep.subr.bf16.mxu0 0
  %151 = vmatpush1.bf16.msra.mxu0 0
  %152 = vmatprep.subr.bf16.mxu0 0
  %153 = vmatpush1.bf16.msra.mxu0 0
  %154 = vmatprep.subr.bf16.mxu0 0
  %155 = vmatpush1.bf16.msra.mxu0 0
  %156 = vmatprep.subr.bf16.mxu0 0
  %157 = vmatpush1.bf16.msra.mxu0 0
  %158 = vmatprep.subr.bf16.mxu0 0
  %159 = vmatpush1.bf16.msra.mxu0 0
  %160 = vmatprep.subr.bf16.mxu0 0
  %161 = vmatpush1.bf16.msra.mxu0 0
  %162 = vmatprep.subr.bf16.mxu0 0
  %163 = vmatpush1.bf16.msra.mxu0 0
  %164 = vmatprep.subr.bf16.mxu0 0
  %165 = vmatpush1.bf16.msra.mxu0 0
  %166 = vmatprep.subr.bf16.mxu0 0
  %167 = vmatpush1.bf16.msra.mxu0 0
  %168 = vmatprep.subr.bf16.mxu0 0
  %169 = vmatpush1.bf16.msra.mxu0 0
  %170 = vmatprep.subr.bf16.mxu0 0
  %171 = vmatpush1.bf16.msra.mxu0 0
  %172 = vmatprep.mubr.bf16.mxu0 0
  %173 = vmatmul.mubr.bf16.gmra.mrb[0].mxu0 %v138
  %v174 = vpop.f32.mrb[0].mxu0
  %v175 = vadd.f32 0.0, %v174
  %v176 = vpop.f32.mrb[0].mxu0
  %v177 = vadd.f32 0.0, %v176
  %v178 = vpop.f32.mrb[0].mxu0
  %v179 = vadd.f32 0.0, %v178
  %v180 = vpop.f32.mrb[0].mxu0
  %181 = vdwg.mxu0
  %v182 = vmul.f32 %v175, %v177
  %v183 = vadd.f32 %v126, %v182
  %v184 = vadd.f32 %v127, %v179
  %v185 = vpack.c.bf16 %v55, %v54
  %s186 = scalar_lea.vmem %s1, 16
  %v187 = vld [vmem:[%s186] sm:$0xf]
  %v188 = vld [vmem:[%s186 + $0x4] sm:$0x1]
  %v191 = vunpack.c.l.b16 %v187
  %v192 = vunpack.c.l.b16 %v188
  %v193 = vpack.c.b16 %v192, %v191
  %v195 = vsel %vm79, %v193, 0
  %197 = vmatprep.subr.bf16.mxu0 %v71
  %198 = vmatpush1.bf16.msra.mxu0 %v185
  %199 = vmatprep.subr.bf16.mxu0 0
  %200 = vmatpush1.bf16.msra.mxu0 0
  %201 = vmatprep.subr.bf16.mxu0 0
  %202 = vmatpush1.bf16.msra.mxu0 0
  %203 = vmatprep.subr.bf16.mxu0 0
  %204 = vmatpush1.bf16.msra.mxu0 0
  %205 = vmatprep.subr.bf16.mxu0 0
  %206 = vmatpush1.bf16.msra.mxu0 0
  %207 = vmatprep.subr.bf16.mxu0 0
  %208 = vmatpush1.bf16.msra.mxu0 0
  %209 = vmatprep.subr.bf16.mxu0 0
  %210 = vmatpush1.bf16.msra.mxu0 0
  %211 = vmatprep.subr.bf16.mxu0 0
  %212 = vmatpush1.bf16.msra.mxu0 0
  %213 = vmatprep.subr.bf16.mxu0 0
  %214 = vmatpush1.bf16.msra.mxu0 0
  %215 = vmatprep.subr.bf16.mxu0 0
  %216 = vmatpush1.bf16.msra.mxu0 0
  %217 = vmatprep.subr.bf16.mxu0 0
  %218 = vmatpush1.bf16.msra.mxu0 0
  %219 = vmatprep.subr.bf16.mxu0 0
  %220 = vmatpush1.bf16.msra.mxu0 0
  %221 = vmatprep.subr.bf16.mxu0 0
  %222 = vmatpush1.bf16.msra.mxu0 0
  %223 = vmatprep.subr.bf16.mxu0 0
  %224 = vmatpush1.bf16.msra.mxu0 0
  %225 = vmatprep.subr.bf16.mxu0 0
  %226 = vmatpush1.bf16.msra.mxu0 0
  %227 = vmatprep.subr.bf16.mxu0 0
  %228 = vmatpush1.bf16.msra.mxu0 0
  %229 = vmatprep.mubr.bf16.mxu0 0
  %230 = vmatmul.mubr.bf16.gmra.mrb[0].mxu0 %v195
  %v231 = vpop.f32.mrb[0].mxu0
  %v232 = vadd.f32 0.0, %v231
  %v233 = vpop.f32.mrb[0].mxu0
  %v234 = vadd.f32 0.0, %v233
  %v235 = vpop.f32.mrb[0].mxu0
  %v236 = vadd.f32 0.0, %v235
  %v237 = vpop.f32.mrb[0].mxu0
  %238 = vdwg.mxu0
  %v239 = vmul.f32 %v232, %v234
  %v240 = vadd.f32 %v183, %v239
  %v241 = vadd.f32 %v184, %v236
  %v242 = vpack.c.bf16 %v67, %v66
  %s243 = scalar_lea.vmem %s1, 24
  %v244 = vld [vmem:[%s243] sm:$0xf]
  %v245 = vld [vmem:[%s243 + $0x4] sm:$0x1]
  %v248 = vunpack.c.l.b16 %v244
  %v249 = vunpack.c.l.b16 %v245
  %v250 = vpack.c.b16 %v249, %v248
  %v252 = vsel %vm79, %v250, 0
  %254 = vmatprep.subr.bf16.mxu0 %v71
  %255 = vmatpush1.bf16.msra.mxu0 %v242
  %256 = vmatprep.subr.bf16.mxu0 0
  %257 = vmatpush1.bf16.msra.mxu0 0
  %258 = vmatprep.subr.bf16.mxu0 0
  %259 = vmatpush1.bf16.msra.mxu0 0
  %260 = vmatprep.subr.bf16.mxu0 0
  %261 = vmatpush1.bf16.msra.mxu0 0
  %262 = vmatprep.subr.bf16.mxu0 0
  %263 = vmatpush1.bf16.msra.mxu0 0
  %264 = vmatprep.subr.bf16.mxu0 0
  %265 = vmatpush1.bf16.msra.mxu0 0
  %266 = vmatprep.subr.bf16.mxu0 0
  %267 = vmatpush1.bf16.msra.mxu0 0
  %268 = vmatprep.subr.bf16.mxu0 0
  %269 = vmatpush1.bf16.msra.mxu0 0
  %270 = vmatprep.subr.bf16.mxu0 0
  %271 = vmatpush1.bf16.msra.mxu0 0
  %272 = vmatprep.subr.bf16.mxu0 0
  %273 = vmatpush1.bf16.msra.mxu0 0
  %274 = vmatprep.subr.bf16.mxu0 0
  %275 = vmatpush1.bf16.msra.mxu0 0
  %276 = vmatprep.subr.bf16.mxu0 0
  %277 = vmatpush1.bf16.msra.mxu0 0
  %278 = vmatprep.subr.bf16.mxu0 0
  %279 = vmatpush1.bf16.msra.mxu0 0
  %280 = vmatprep.subr.bf16.mxu0 0
  %281 = vmatpush1.bf16.msra.mxu0 0
  %282 = vmatprep.subr.bf16.mxu0 0
  %283 = vmatpush1.bf16.msra.mxu0 0
  %284 = vmatprep.subr.bf16.mxu0 0
  %285 = vmatpush1.bf16.msra.mxu0 0
  %286 = vmatprep.mubr.bf16.mxu0 0
  %287 = vmatmul.mubr.bf16.gmra.mrb[0].mxu0 %v252
  %v288 = vpop.f32.mrb[0].mxu0
  %v289 = vadd.f32 0.0, %v288
  %v290 = vpop.f32.mrb[0].mxu0
  %v291 = vadd.f32 0.0, %v290
  %v292 = vpop.f32.mrb[0].mxu0
  %v293 = vadd.f32 0.0, %v292
  %v294 = vpop.f32.mrb[0].mxu0
  %295 = vdwg.mxu0
  %v296 = vmul.f32 %v289, %v291
  %v297 = vadd.f32 %v240, %v296
  %v298 = vadd.f32 %v241, %v293
  %v299 = vld [vmem:[%s2] sm:$0xff]
  %vm300 = vcmask 64512
  %v302 = vsel %vm300, %v299, 0
  %304 = vmatprep.subr.mxu0 0.0
  %305 = vmatpush1.msra.mxu0 %v297
  %306 = vmatprep.subr.mxu0 0.0
  %307 = vmatpush1.msra.mxu0 0.0
  %308 = vmatprep.subr.mxu0 0.0
  %309 = vmatpush1.msra.mxu0 0.0
  %310 = vmatprep.subr.mxu0 0.0
  %311 = vmatpush1.msra.mxu0 0.0
  %312 = vmatprep.subr.mxu0 0.0
  %313 = vmatpush1.msra.mxu0 0.0
  %314 = vmatprep.subr.mxu0 0.0
  %315 = vmatpush1.msra.mxu0 0.0
  %316 = vmatprep.subr.mxu0 0.0
  %317 = vmatpush1.msra.mxu0 0.0
  %318 = vmatprep.subr.mxu0 0.0
  %319 = vmatpush1.msra.mxu0 0.0
  %320 = vmatprep.subr.mxu0 0.0
  %321 = vmatpush1.msra.mxu0 0.0
  %322 = vmatprep.subr.mxu0 0.0
  %323 = vmatpush1.msra.mxu0 0.0
  %324 = vmatprep.subr.mxu0 0.0
  %325 = vmatpush1.msra.mxu0 0.0
  %326 = vmatprep.subr.mxu0 0.0
  %327 = vmatpush1.msra.mxu0 0.0
  %328 = vmatprep.subr.mxu0 0.0
  %329 = vmatpush1.msra.mxu0 0.0
  %330 = vmatprep.subr.mxu0 0.0
  %331 = vmatpush1.msra.mxu0 0.0
  %332 = vmatprep.subr.mxu0 0.0
  %333 = vmatpush1.msra.mxu0 0.0
  %334 = vmatprep.subr.mxu0 0.0
  %335 = vmatpush1.msra.mxu0 0.0
  %336 = vmatprep.subr.mxu0 0.0
  %337 = vmatpush1.msra.mxu0 0.0
  %338 = vmatprep.subr.mxu0 0.0
  %339 = vmatpush1.msra.mxu0 0.0
  %340 = vmatprep.subr.mxu0 0.0
  %341 = vmatpush1.msra.mxu0 0.0
  %342 = vmatprep.subr.mxu0 0.0
  %343 = vmatpush1.msra.mxu0 0.0
  %344 = vmatprep.subr.mxu0 0.0
  %345 = vmatpush1.msra.mxu0 0.0
  %346 = vmatprep.subr.mxu0 0.0
  %347 = vmatpush1.msra.mxu0 0.0
  %348 = vmatprep.subr.mxu0 0.0
  %349 = vmatpush1.msra.mxu0 0.0
  %350 = vmatprep.subr.mxu0 0.0
  %351 = vmatpush1.msra.mxu0 0.0
  %352 = vmatprep.subr.mxu0 0.0
  %353 = vmatpush1.msra.mxu0 0.0
  %354 = vmatprep.subr.mxu0 0.0
  %355 = vmatpush1.msra.mxu0 0.0
  %356 = vmatprep.subr.mxu0 0.0
  %357 = vmatpush1.msra.mxu0 0.0
  %358 = vmatprep.subr.mxu0 0.0
  %359 = vmatpush1.msra.mxu0 0.0
  %360 = vmatprep.subr.mxu0 0.0
  %361 = vmatpush1.msra.mxu0 0.0
  %362 = vmatprep.subr.mxu0 0.0
  %363 = vmatpush1.msra.mxu0 0.0
  %364 = vmatprep.subr.mxu0 0.0
  %365 = vmatpush1.msra.mxu0 0.0
  %366 = vmatprep.subr.mxu0 0.0
  %367 = vmatpush1.msra.mxu0 0.0
  %368 = vmatprep.mubr.f32.mxu0 0.0
  %369 = vmatmul.mubr.f32.gmra.mrb[0].mxu0 %v302
  %v370 = vpop.f32.mrb[0].mxu0
  %v371 = vadd.f32 0.0, %v370
  %v372 = vpop.f32.mrb[0].mxu0
  %373 = vdwg.mxu0
  %v374 = vrot.slane %v371, 4
  %v375 = vmax.f32 %v371, %v374
  %v376 = vrot.slane %v375, 2
  %v377 = vmax.f32 %v375, %v376
  %v378 = vrot.slane %v377, 1
  %v379 = vmax.f32 %v377, %v378
  %v380 = vsub.f32 %v371, %v379
  %v381 = vmul.f32 %v380, 1.442695
  %v382 = vpow.pop %v381
  %v383 = vrot.slane %v382, 4
  %v384 = vadd.f32 %v382, %v383
  %v385 = vrot.slane %v384, 2
  %v386 = vadd.f32 %v384, %v385
  %v387 = vrot.slane %v386, 1
  %v388 = vadd.f32 %v386, %v387
  %v389 = vrcp.pop %v388
  %v390 = vmul.f32 %v382, %v389
  %v391 = vmul.f32 %v390, %v297
  %v392 = vld [vmem:[%s3] sm:$0xff]
  %394 = vset.pattern.permute.xlu0 0
  %395 = vperm.xlu0 %394, %v392
  %v396 = vpop.permute.xlu0 %395
  %v398 = vmul.f32 %v391, %v396
  %v399 = vrot.slane %v398, 4
  %v400 = vadd.f32 %v398, %v399
  %v401 = vrot.slane %v400, 2
  %v402 = vadd.f32 %v400, %v401
  %v403 = vrot.slane %v402, 1
  %v404 = vadd.f32 %v402, %v403
  %v405 = vadd.f32 %v298, %v404
  %406 = vst [vmem:[%s4] sm:$0x1] %v405
  // Predicated region
  $region18: #{afm_forward.1} parent=0 // pred_check
    _
  $region19: #{afm_forward.1} parent=0 // pred_check_branch
    %408 = sbr.rel (0) target = $region21
  $region20: #{afm_forward.1} parent=0 // pred_region
    _
  $region21: #{afm_forward.1} parent=0 // pred_fallthru
    _
  // Predicated region
  $region22: #{afm_forward.1} parent=0 // pred_check
    _
  $region23: #{afm_forward.1} parent=0 // pred_check_branch
    %410 = sbr.rel (0) target = $region25
  $region24: #{afm_forward.1} parent=0 // pred_region
    _
  $region25: #{afm_forward.1} parent=0 // pred_fallthru
    _

</llo_original>
